<compile_context>
chip_gen: v7x
topology: tpu7x:2x2x1
jax: 0.10.0
libtpu: 0.0.40
codegen_flags: <defaults>
</compile_context>

<pallas_src>
import math

import jax
import jax.numpy as jnp
from jax import lax
from jax.experimental import pallas as pl
from jax.experimental.pallas import tpu as pltpu


def _round_up(x, m):
    return (x + m - 1) // m * m


def _make_kernel(*, tl, kernel_size, pad, c_in, c_out, l_total):
    K = kernel_size
    pad_r = K - 1 - pad          # right halo width
    tlw = tl + K - 1             # window length for one output tile

    def gabor_conv1d_kernel(w_ref, x_ref, o_ref, carry_ref):
        # w_ref:     (K, C_out, C_in)  VMEM-resident Gabor bank (tap-major)
        # x_ref:     (1, C_in, TL)     current unpadded x block
        # o_ref:     (1, C_out, TL)    output tile t = l-1
        # carry_ref: (C_in, TL+pad)    sliding window x[l*TL-pad : (l+1)*TL)
        l = pl.program_id(1)
        cur = x_ref[0]                                        # (C_in, TL)

        @pl.when(l > 0)
        def _compute():
            t = l - 1
            if pad_r > 0:
                window = jnp.concatenate([carry_ref[...], cur[:, :pad_r]],
                                         axis=1)              # (C_in, TL+K-1)
            else:
                window = carry_ref[...]
            # Zero the halo: positions < 0 (left pad / stale carry) and
            # positions >= L (right pad, partial-block garbage, stale tail).
            pos = (t * tl - pad) + lax.broadcasted_iota(jnp.int32,
                                                        (c_in, tlw), 1)
            window = jnp.where((pos >= 0) & (pos < l_total), window,
                               jnp.zeros_like(window))
            acc = jnp.zeros((c_out, tl), jnp.float32)
            for k in range(K):     # K tiny MXU pushes; MXU is otherwise idle
                acc = acc + jnp.dot(w_ref[k], window[:, k:k + tl],
                                    preferred_element_type=jnp.float32)
            o_ref[0] = acc.astype(o_ref.dtype)

        # Carry update (after compute): new carry = x[l*TL-pad : (l+1)*TL).
        # At l == 0 / after a batch change the stale left part is masked by
        # the position test above, so no explicit reset is needed.
        if pad > 0:
            tail = carry_ref[:, tl:tl + pad]   # old x[l*TL-pad : l*TL)
            carry_ref[:, :pad] = tail
            carry_ref[:, pad:] = cur
        else:
            carry_ref[...] = cur

    return gabor_conv1d_kernel


def trainable_gabor_filter_1d(x, lambda_, psi, sigma, kernel_size, *,
                              tl_max=2048):
    """x: (N, C_in, L).  Params: (C_out, C_in).  Returns (N, C_out, L_out)."""
    N, C_in, L = x.shape
    C_out = lambda_.shape[0]
    K = int(kernel_size)
    pad = K // 2
    L_out = L + 2 * pad - (K - 1)       # == F.conv1d(..., padding=K//2) length

    # ---- Gabor bank built once on the host (hoisted transcendentals).
    t = jnp.arange(K, dtype=jnp.float32) - (K // 2)
    gab = (jnp.exp(-0.5 * (t[:, None, None] ** 2) / (sigma[None, ...] ** 2)) *
           jnp.cos(2.0 * math.pi * t[:, None, None] / lambda_[None, ...]
                   + psi[None, ...]))                        # (K, C_out, C_in)
    w = gab.astype(x.dtype)
    # TODO(synk): for bf16 inputs everything streams in bf16 automatically
    # (accumulation stays f32); tolerances vs an f32 reference then widen.

    # ---- L tiling: lane-dense tile (multiple of 128).
    TL = min(_round_up(L_out, 128), max(128, _round_up(tl_max, 128)))
    num_l = pl.cdiv(L_out, TL)          # output tiles
    nx = pl.cdiv(L, TL)                 # x blocks

    kernel = _make_kernel(tl=TL, kernel_size=K, pad=pad, c_in=C_in,
                          c_out=C_out, l_total=L)

    # ---- VMEM budget (generation-aware cap).
    itemsize = jnp.dtype(x.dtype).itemsize
    need = (2 * C_in * TL * itemsize            # double-buffered x block
            + 2 * C_out * TL * itemsize         # double-buffered out tile
            + C_in * (TL + pad) * itemsize      # carry scratch
            + 2 * K * max(C_out, 8) * 128 * itemsize)  # resident weights
    try:
        cap = int(getattr(pltpu.get_tpu_info(), "vmem_capacity_bytes",
                          64 * 1024 * 1024))
    except Exception:
        cap = 64 * 1024 * 1024
    vmem_limit = int(min(max(32 * 1024 * 1024, 2 * need),
                         cap - 16 * 1024 * 1024))
    vmem_limit = max(vmem_limit, 16 * 1024 * 1024)

    cost = pl.CostEstimate(
        flops=2 * N * C_out * C_in * K * L_out,
        transcendentals=0,
        bytes_accessed=int(N * C_in * L * itemsize
                           + N * C_out * L_out * itemsize
                           + K * C_out * C_in * itemsize))

    out = pl.pallas_call(
        kernel,
        out_shape=jax.ShapeDtypeStruct((N, C_out, L_out), x.dtype),
        grid_spec=pltpu.PrefetchScalarGridSpec(
            num_scalar_prefetch=0,
            grid=(N, num_l + 1),     # one extra L step: output is 1 tile behind
            in_specs=[
                # Gabor bank: constant index_map -> fetched once, resident.
                pl.BlockSpec((K, C_out, C_in), lambda n, l: (0, 0, 0)),
                # Unpadded x: disjoint TL blocks; clamp re-reads the last
                # block on the extra step (same index => no extra DMA).
                pl.BlockSpec((1, C_in, TL),
                             lambda n, l: (n, 0, jnp.minimum(l, nx - 1))),
            ],
            out_specs=pl.BlockSpec((1, C_out, TL),
                                   lambda n, l: (n, 0, jnp.maximum(l - 1, 0))),
            scratch_shapes=[pltpu.VMEM((C_in, TL + pad), x.dtype)],
        ),
        compiler_params=pltpu.CompilerParams(
            # Batch axis parallel (v7x megacore); L axis carries state.
            dimension_semantics=("parallel", "arbitrary"),
            vmem_limit_bytes=vmem_limit,
        ),
        cost_estimate=cost,
    )(w, x)
    return out


def _reference(x, lambda_, psi, sigma, kernel_size):
    """Pure-JAX reference mirroring the PyTorch forward."""
    K = kernel_size
    t = jnp.arange(K, dtype=jnp.float32) - K // 2
    gab = (jnp.exp(-0.5 * (t[None, None, :] ** 2) / (sigma[..., None] ** 2)) *
           jnp.cos(2.0 * math.pi * t[None, None, :] / lambda_[..., None]
                   + psi[..., None]))                        # (C_out, C_in, K)
    return jax.lax.conv_general_dilated(
        x, gab, window_strides=(1,), padding=[(K // 2, K // 2)],
        dimension_numbers=("NCH", "OIH", "NCH"))


if __name__ == "__main__":
    N, C_in, C_out, K = 2, 4, 8, 7

    key = jax.random.PRNGKey(0)
    k_lam, k_theta, k_psi, k_sig, kx1, kx2, kx3 = jax.random.split(key, 7)

    # Deterministic parameter init matching torch's __init__ distributions.
    lambda_ = jax.random.uniform(k_lam, (C_out, C_in), jnp.float32) * 10.0 + 1.0
    theta = jax.random.uniform(k_theta, (C_out, C_in), jnp.float32) * math.pi  # unused in forward
    psi = jax.random.uniform(k_psi, (C_out, C_in), jnp.float32) * math.pi
    sigma = jax.random.uniform(k_sig, (C_out, C_in), jnp.float32) * 5.0 + 1.0
    gamma = jnp.ones((C_out, C_in), jnp.float32)                               # unused in forward

    def check(x, tl_max):
        out = jax.block_until_ready(
            trainable_gabor_filter_1d(x, lambda_, psi, sigma, K, tl_max=tl_max))
        ref = _reference(x, lambda_, psi, sigma, K)
        assert out.shape == ref.shape, (out.shape, ref.shape)
        err = float(jnp.max(jnp.abs(out - ref)))
        assert err < 2e-4, err

    # 1) single output tile (L < 128)
    check(jax.random.normal(kx1, (N, C_in, 16), jnp.float32), 1024)
    # 2) multi-tile with a partial last tile (masked output writeback)
    check(jax.random.normal(kx2, (N, C_in, 200), jnp.float32), 128)
    # 3) L an exact multiple of TL (exercises the stale right-halo masking)
    check(jax.random.normal(kx3, (N, C_in, 256), jnp.float32), 128)

    print("KERNEL_OK")
</pallas_src>

<mosaic_0001>
module attributes {stable_mosaic.version = 11 : i64} {
  func.func @gabor_conv1d_kernel(%arg0: i32, %arg1: i32, %arg2: memref<7x8x4xf32, #tpu.memory_space<vmem>>, %arg3: memref<1x4x128xf32, #tpu.memory_space<vmem>>, %arg4: memref<1x8x128xf32, #tpu.memory_space<vmem>>, %arg5: memref<4x131xf32, #tpu.memory_space<vmem>>) attributes {dimension_semantics = [#tpu.dimension_semantics<parallel>, #tpu.dimension_semantics<arbitrary>], iteration_bounds = array<i64: 2, 2>, scalar_prefetch = 0 : i64, scratch_operands = 1 : i64, tpu.core_type = #tpu.core_type<tc>, window_params = [{pipeline_mode = #tpu.pipeline_mode<synchronous>, transform_indices = @transform_0, window_bounds = array<i64: 7, 8, 4>}, {transform_indices = @transform_1, window_bounds = array<i64: 1, 4, 128>}, {transform_indices = @transform_2, window_bounds = array<i64: 1, 8, 128>}]} {
    %c0 = arith.constant 0 : index
    %c0_0 = arith.constant 0 : index
    %c0_1 = arith.constant 0 : index
    %0 = vector.load %arg3[%c0, %c0_0, %c0_1] : memref<1x4x128xf32, #tpu.memory_space<vmem>>, vector<1x4x128xf32>
    %1 = vector.shape_cast %0 : vector<1x4x128xf32> to vector<4x128xf32>
    %c0_i32 = arith.constant 0 : i32
    %2 = arith.cmpi sgt, %arg1, %c0_i32 : i32
    %3 = arith.extui %2 : i1 to i32
    %c0_i32_2 = arith.constant 0 : i32
    %4 = arith.cmpi ne, %3, %c0_i32_2 : i32
    scf.if %4 {
      %c1_i32 = arith.constant 1 : i32
      %8 = arith.subi %arg1, %c1_i32 : i32
      %c0_7 = arith.constant 0 : index
      %c0_8 = arith.constant 0 : index
      %9 = vector.load %arg5[%c0_7, %c0_8] : memref<4x131xf32, #tpu.memory_space<vmem>>, vector<4x131xf32>
      %10 = vector.extract_strided_slice %1 {offsets = [0, 0], sizes = [4, 3], strides = [1, 1]} : vector<4x128xf32> to vector<4x3xf32>
      %11 = tpu.concatenate %9, %10 in 1 : vector<4x131xf32>, vector<4x3xf32> -> vector<4x134xf32>
      %c128_i32 = arith.constant 128 : i32
      %12 = arith.muli %8, %c128_i32 : i32
      %c3_i32 = arith.constant 3 : i32
      %13 = arith.subi %12, %c3_i32 : i32
      %14 = tpu.iota {dimensions = array<i32: 1>} : vector<4x134xi32>
      %15 = vector.broadcast %13 : i32 to vector<4x134xi32>
      %16 = arith.addi %15, %14 : vector<4x134xi32>
      %c0_i32_9 = arith.constant 0 : i32
      %17 = vector.broadcast %c0_i32_9 : i32 to vector<4x134xi32>
      %18 = arith.cmpi sge, %16, %17 : vector<4x134xi32>
      %c16_i32 = arith.constant 16 : i32
      %19 = vector.broadcast %c16_i32 : i32 to vector<4x134xi32>
      %20 = arith.cmpi slt, %16, %19 : vector<4x134xi32>
      %21 = arith.andi %18, %20 : vector<4x134xi1>
      %cst = arith.constant 0.000000e+00 : f32
      %22 = vector.broadcast %cst : f32 to vector<4x134xf32>
      %23 = arith.select %21, %11, %22 : vector<4x134xi1>, vector<4x134xf32>
      %cst_10 = arith.constant 0.000000e+00 : f32
      %24 = vector.broadcast %cst_10 : f32 to vector<8x128xf32>
      %c0_11 = arith.constant 0 : index
      %c0_12 = arith.constant 0 : index
      %c0_13 = arith.constant 0 : index
      %25 = vector.load %arg2[%c0_11, %c0_12, %c0_13] : memref<7x8x4xf32, #tpu.memory_space<vmem>>, vector<1x8x4xf32>
      %26 = vector.shape_cast %25 : vector<1x8x4xf32> to vector<8x4xf32>
      %27 = vector.extract_strided_slice %23 {offsets = [0, 0], sizes = [4, 128], strides = [1, 1]} : vector<4x134xf32> to vector<4x128xf32>
      %cst_14 = arith.constant dense<0.000000e+00> : vector<8x128xf32>
      %28 = tpu.matmul %26, %27, %cst_14 {dimension_numbers = #tpu.dot_dimension_numbers<[1], [0], [0], [1], [0, 0, 1, 1], [], []>} : vector<8x4xf32>, vector<4x128xf32>, vector<8x128xf32> -> vector<8x128xf32>
      %29 = arith.addf %24, %28 : vector<8x128xf32>
      %c1 = arith.constant 1 : index
      %c0_15 = arith.constant 0 : index
      %c0_16 = arith.constant 0 : index
      %30 = vector.load %arg2[%c1, %c0_15, %c0_16] : memref<7x8x4xf32, #tpu.memory_space<vmem>>, vector<1x8x4xf32>
      %31 = vector.shape_cast %30 : vector<1x8x4xf32> to vector<8x4xf32>
      %32 = vector.extract_strided_slice %23 {offsets = [0, 1], sizes = [4, 128], strides = [1, 1]} : vector<4x134xf32> to vector<4x128xf32>
      %cst_17 = arith.constant dense<0.000000e+00> : vector<8x128xf32>
      %33 = tpu.matmul %31, %32, %cst_17 {dimension_numbers = #tpu.dot_dimension_numbers<[1], [0], [0], [1], [0, 0, 1, 1], [], []>} : vector<8x4xf32>, vector<4x128xf32>, vector<8x128xf32> -> vector<8x128xf32>
      %34 = arith.addf %29, %33 : vector<8x128xf32>
      %c2 = arith.constant 2 : index
      %c0_18 = arith.constant 0 : index
      %c0_19 = arith.constant 0 : index
      %35 = vector.load %arg2[%c2, %c0_18, %c0_19] : memref<7x8x4xf32, #tpu.memory_space<vmem>>, vector<1x8x4xf32>
      %36 = vector.shape_cast %35 : vector<1x8x4xf32> to vector<8x4xf32>
      %37 = vector.extract_strided_slice %23 {offsets = [0, 2], sizes = [4, 128], strides = [1, 1]} : vector<4x134xf32> to vector<4x128xf32>
      %cst_20 = arith.constant dense<0.000000e+00> : vector<8x128xf32>
      %38 = tpu.matmul %36, %37, %cst_20 {dimension_numbers = #tpu.dot_dimension_numbers<[1], [0], [0], [1], [0, 0, 1, 1], [], []>} : vector<8x4xf32>, vector<4x128xf32>, vector<8x128xf32> -> vector<8x128xf32>
      %39 = arith.addf %34, %38 : vector<8x128xf32>
      %c3_21 = arith.constant 3 : index
      %c0_22 = arith.constant 0 : index
      %c0_23 = arith.constant 0 : index
      %40 = vector.load %arg2[%c3_21, %c0_22, %c0_23] : memref<7x8x4xf32, #tpu.memory_space<vmem>>, vector<1x8x4xf32>
      %41 = vector.shape_cast %40 : vector<1x8x4xf32> to vector<8x4xf32>
      %42 = vector.extract_strided_slice %23 {offsets = [0, 3], sizes = [4, 128], strides = [1, 1]} : vector<4x134xf32> to vector<4x128xf32>
      %cst_24 = arith.constant dense<0.000000e+00> : vector<8x128xf32>
      %43 = tpu.matmul %41, %42, %cst_24 {dimension_numbers = #tpu.dot_dimension_numbers<[1], [0], [0], [1], [0, 0, 1, 1], [], []>} : vector<8x4xf32>, vector<4x128xf32>, vector<8x128xf32> -> vector<8x128xf32>
      %44 = arith.addf %39, %43 : vector<8x128xf32>
      %c4 = arith.constant 4 : index
      %c0_25 = arith.constant 0 : index
      %c0_26 = arith.constant 0 : index
      %45 = vector.load %arg2[%c4, %c0_25, %c0_26] : memref<7x8x4xf32, #tpu.memory_space<vmem>>, vector<1x8x4xf32>
      %46 = vector.shape_cast %45 : vector<1x8x4xf32> to vector<8x4xf32>
      %47 = vector.extract_strided_slice %23 {offsets = [0, 4], sizes = [4, 128], strides = [1, 1]} : vector<4x134xf32> to vector<4x128xf32>
      %cst_27 = arith.constant dense<0.000000e+00> : vector<8x128xf32>
      %48 = tpu.matmul %46, %47, %cst_27 {dimension_numbers = #tpu.dot_dimension_numbers<[1], [0], [0], [1], [0, 0, 1, 1], [], []>} : vector<8x4xf32>, vector<4x128xf32>, vector<8x128xf32> -> vector<8x128xf32>
      %49 = arith.addf %44, %48 : vector<8x128xf32>
      %c5 = arith.constant 5 : index
      %c0_28 = arith.constant 0 : index
      %c0_29 = arith.constant 0 : index
      %50 = vector.load %arg2[%c5, %c0_28, %c0_29] : memref<7x8x4xf32, #tpu.memory_space<vmem>>, vector<1x8x4xf32>
      %51 = vector.shape_cast %50 : vector<1x8x4xf32> to vector<8x4xf32>
      %52 = vector.extract_strided_slice %23 {offsets = [0, 5], sizes = [4, 128], strides = [1, 1]} : vector<4x134xf32> to vector<4x128xf32>
      %cst_30 = arith.constant dense<0.000000e+00> : vector<8x128xf32>
      %53 = tpu.matmul %51, %52, %cst_30 {dimension_numbers = #tpu.dot_dimension_numbers<[1], [0], [0], [1], [0, 0, 1, 1], [], []>} : vector<8x4xf32>, vector<4x128xf32>, vector<8x128xf32> -> vector<8x128xf32>
      %54 = arith.addf %49, %53 : vector<8x128xf32>
      %c6 = arith.constant 6 : index
      %c0_31 = arith.constant 0 : index
      %c0_32 = arith.constant 0 : index
      %55 = vector.load %arg2[%c6, %c0_31, %c0_32] : memref<7x8x4xf32, #tpu.memory_space<vmem>>, vector<1x8x4xf32>
      %56 = vector.shape_cast %55 : vector<1x8x4xf32> to vector<8x4xf32>
      %57 = vector.extract_strided_slice %23 {offsets = [0, 6], sizes = [4, 128], strides = [1, 1]} : vector<4x134xf32> to vector<4x128xf32>
      %cst_33 = arith.constant dense<0.000000e+00> : vector<8x128xf32>
      %58 = tpu.matmul %56, %57, %cst_33 {dimension_numbers = #tpu.dot_dimension_numbers<[1], [0], [0], [1], [0, 0, 1, 1], [], []>} : vector<8x4xf32>, vector<4x128xf32>, vector<8x128xf32> -> vector<8x128xf32>
      %59 = arith.addf %54, %58 : vector<8x128xf32>
      %c0_34 = arith.constant 0 : index
      %c0_35 = arith.constant 0 : index
      %c0_36 = arith.constant 0 : index
      %60 = vector.load %arg4[%c0_34, %c0_35, %c0_36] : memref<1x8x128xf32, #tpu.memory_space<vmem>>, vector<1x8x128xf32>
      %61 = vector.shape_cast %60 : vector<1x8x128xf32> to vector<8x128xf32>
      %62 = vector.shape_cast %59 : vector<8x128xf32> to vector<1x8x128xf32>
      tpu.vector_store %arg4[%c0_34, %c0_35, %c0_36], %62 {strides = array<i32>} : memref<1x8x128xf32, #tpu.memory_space<vmem>>, vector<1x8x128xf32>,
    } else {
    }
    %c0_3 = arith.constant 0 : index
    %c128 = arith.constant 128 : index
    %5 = vector.load %arg5[%c0_3, %c128] : memref<4x131xf32, #tpu.memory_space<vmem>>, vector<4x3xf32>
    %c0_4 = arith.constant 0 : index
    %c0_5 = arith.constant 0 : index
    %6 = vector.load %arg5[%c0_4, %c0_5] : memref<4x131xf32, #tpu.memory_space<vmem>>, vector<4x3xf32>
    tpu.vector_store %arg5[%c0_4, %c0_5], %5 {strides = array<i32>} : memref<4x131xf32, #tpu.memory_space<vmem>>, vector<4x3xf32>,
    %c0_6 = arith.constant 0 : index
    %c3 = arith.constant 3 : index
    %7 = vector.load %arg5[%c0_6, %c3] : memref<4x131xf32, #tpu.memory_space<vmem>>, vector<4x128xf32>
    tpu.vector_store %arg5[%c0_6, %c3], %1 {strides = array<i32>} : memref<4x131xf32, #tpu.memory_space<vmem>>, vector<4x128xf32>,
    return
  }
  func.func @transform_0(%arg0: i32, %arg1: i32) -> (i32, i32, i32) {
    %c0_i32 = arith.constant 0 : i32
    %c0_i32_0 = arith.constant 0 : i32
    %c0_i32_1 = arith.constant 0 : i32
    %c0_i32_2 = arith.constant 0 : i32
    return %c0_i32, %c0_i32_0, %c0_i32_1 : i32, i32, i32
  }
  func.func @transform_1(%arg0: i32, %arg1: i32) -> (i32, i32, i32) {
    %c0_i32 = arith.constant 0 : i32
    %0 = arith.minsi %arg1, %c0_i32 : i32
    %c0_i32_0 = arith.constant 0 : i32
    %c0_i32_1 = arith.constant 0 : i32
    return %arg0, %c0_i32_0, %0 : i32, i32, i32
  }
  func.func @transform_2(%arg0: i32, %arg1: i32) -> (i32, i32, i32) {
    %c1_i32 = arith.constant 1 : i32
    %0 = arith.subi %arg1, %c1_i32 : i32
    %c0_i32 = arith.constant 0 : i32
    %1 = arith.maxsi %0, %c0_i32 : i32
    %c0_i32_0 = arith.constant 0 : i32
    %c0_i32_1 = arith.constant 0 : i32
    return %arg0, %c0_i32_0, %1 : i32, i32, i32
  }
}

</mosaic_0001>

<llo_original>
// kernel: tpu_custom_call.1
$region0: #{tpu_custom_call.1}
  #allocation0 [shape = 'u32[]', space=smem, size = 0x4, offset = 0x4, fixed_abs, tag = 'smem constant byte address 0x4 - core index']
  #allocation1 [shape = 'u32[144,128]{1,0:T(1,128)}', space=vmem, size = 0x12000, scoped, tag = 'internal scratch']
  #allocation2 [shape = 'f32[4,131]{1,0:T(4,128)}', space=vmem, size = 0x1000, scoped, tag = 'scratch operand']
  %s0 = inlined_call_operand.vmem [shape: f32[7,8,4], index: 0, kind: input, shape index: {}]
  %s1 = inlined_call_operand.vmem [shape: f32[2,4,16], index: 1, kind: input, shape index: {}]
  %s2 = inlined_call_operand.hbm [shape: f32[2,8,16], index: 2, kind: output, shape index: {}]
  %s3 = sld [smem:[#allocation0]]
  $region45: #{tpu_custom_call.1} parent=0
    _
  %s5 = ssub.s32 1, %s3
  %s6 = scalar_select 0, %s5, %s3
  $region1: #{tpu_custom_call.1} parent=0
    #allocation3 [shape = 'u8[8192]{0}', space=vmem, size = 0x2000, scoped, tag = 'output window, operand 0']
    #allocation4 [shape = 's32[2]{0}', space=sflag, size = 0x8, scoped, tag = 'scoped memory for tpu_custom_call.1']
    %7 = vsyncpa [#allocation4], 0
    %s8 = scalar_lea.sflag [#allocation4], 1
    %9 = vsyncpa %s8, 0
    loop: start=0, step=1, limit=6
    $region2: #{tpu_custom_call.1} parent=1 // loop_pre_header
      _
    $region3: #{tpu_custom_call.1} parent=1 // loop_header
      %s11 = sphi 0, %s15
      %p12 = scmp.ge.s32.totalorder %s11, 6
      %s18 = sphi 0, %s30
      %s19 = sphi 0, %s26
      %s20 = sphi 0, %s18
      %s21 = sphi 0, %s19
      %s22 = sphi 0, %s20
      %s23 = sphi 0, %s21
      %s31 = sphi 0, %s31
      %s33 = sphi 0, %s31
      %s34 = sphi 0, %s33
      %s48 = sphi 0, %s34
      %s60 = sphi 0, %s62
      %s63 = sphi 0, %s60
      %s64 = sphi 0, %s63
      %s80 = sphi 0, %s64
      %s94 = sphi 0, %s96
      %s97 = sphi 0, %s94
      %s98 = sphi 0, %s97
      %s114 = sphi 0, %s98
    $region4: #{tpu_custom_call.1} parent=1 // loop_header_branch
      %14 = sbr.rel (%p12) target = $region8
    $region5: #{tpu_custom_call.1} parent=1 // loop_body
      %s16 = ssub.s32 %s11, 1
      %s17 = ssub.s32 %s11, 2
      %s24 = sadd.s32 1, %s19
      %p25 = scmp.ge.s32.totalorder %s24, 2
      %s26 = scalar_select %p25, 0, %s24
      %s27 = sadd.s32 1, %s18
      %s28 = scalar_select %p25, %s27, %s18
      %p29 = scmp.ge.s32.totalorder %s28, 2
      %s30 = scalar_select %p29, 0, %s28
      %s32 = sadd.s32 %s31, 1
      %p35 = scmp.eq.s32.totalorder %s11, 3
      %p36 = scmp.ne.s32.totalorder %s31, %s33
      %p37 = scmp.eq.s32.totalorder %s11, 0
      %p38 = por %p36, %p37
      %p39 = scmp.ne.s32.totalorder %s31, %s33
      %p40 = scmp.eq.s32.totalorder %s16, 3
      %p41 = por %p39, %p40
      %p42 = scmp.ne.s32.totalorder %s33, %s34
      %p43 = scmp.eq.s32.totalorder %s16, 0
      %p44 = por %p42, %p43
      %p45 = scmp.ne.s32.totalorder %s33, %s34
      %p46 = scmp.eq.s32.totalorder %s17, 3
      %p47 = por %p45, %p46
      %p49 = scmp.ne.s32.totalorder %s34, %s48
      %p50 = scmp.eq.s32.totalorder %s17, 0
      %p51 = por %p49, %p50
      %p52 = scmp.lt.s32.totalorder %s19, 0
      %s53 = scalar_select %p52, %s19, 0
      %p54 = scmp.lt.s32.totalorder %s26, 0
      %s55 = scalar_select %p54, %s26, 0
      %s56 = ssub.s32 %s18, %s30
      %s57 = ssub.s32 %s53, %s55
      %s58 = sor.u32 %s56, %s57
      %p59 = scmp.eq.s32.totalorder %s58, 0
      %s61 = sadd.s32 %s60, 1
      %s62 = scalar_select %p59, %s60, %s61
      %p65 = pneg %p59
      %p66 = scmp.eq.s32.totalorder %s11, 3
      %p67 = por %p65, %p66
      %p68 = scmp.ne.s32.totalorder %s60, %s63
      %p69 = scmp.eq.s32.totalorder %s11, 0
      %p70 = por %p68, %p69
      %p71 = scmp.ne.s32.totalorder %s60, %s63
      %p72 = scmp.eq.s32.totalorder %s16, 3
      %p73 = por %p71, %p72
      %p74 = scmp.ne.s32.totalorder %s63, %s64
      %p75 = scmp.eq.s32.totalorder %s16, 0
      %p76 = por %p74, %p75
      %p77 = scmp.ne.s32.totalorder %s63, %s64
      %p78 = scmp.eq.s32.totalorder %s17, 3
      %p79 = por %p77, %p78
      %p81 = scmp.ne.s32.totalorder %s64, %s80
      %p82 = scmp.eq.s32.totalorder %s17, 0
      %p83 = por %p81, %p82
      %s84 = ssub.s32 %s19, 1
      %p85 = scmp.gt.s32.totalorder %s84, 0
      %s86 = scalar_select %p85, %s84, 0
      %s87 = ssub.s32 %s26, 1
      %p88 = scmp.gt.s32.totalorder %s87, 0
      %s89 = scalar_select %p88, %s87, 0
      %s90 = ssub.s32 %s18, %s30
      %s91 = ssub.s32 %s86, %s89
      %s92 = sor.u32 %s90, %s91
      %p93 = scmp.eq.s32.totalorder %s92, 0
      %s95 = sadd.s32 %s94, 1
      %s96 = scalar_select %p93, %s94, %s95
      %p99 = pneg %p93
      %p100 = scmp.eq.s32.totalorder %s11, 3
      %p101 = por %p99, %p100
      %p102 = scmp.ne.s32.totalorder %s94, %s97
      %p103 = scmp.eq.s32.totalorder %s11, 0
      %p104 = por %p102, %p103
      %p105 = scmp.ne.s32.totalorder %s94, %s97
      %p106 = scmp.eq.s32.totalorder %s16, 3
      %p107 = por %p105, %p106
      %p108 = scmp.ne.s32.totalorder %s97, %s98
      %p109 = scmp.eq.s32.totalorder %s16, 0
      %p110 = por %p108, %p109
      %p111 = scmp.ne.s32.totalorder %s97, %s98
      %p112 = scmp.eq.s32.totalorder %s17, 3
      %p113 = por %p111, %p112
      %p115 = scmp.ne.s32.totalorder %s98, %s114
      %p116 = scmp.eq.s32.totalorder %s17, 0
      %p117 = por %p115, %p116
      %p118 = scmp.le.s32.totalorder 1, %s11
      %p119 = scmp.lt.s32.totalorder %s11, 5
      %p120 = pnand %p118, %p119
      %p121 = pneg %p120
      // Predicated region
      $region9: #{tpu_custom_call.1} parent=5 // pred_check
        _
      $region10: #{tpu_custom_call.1} parent=5 // pred_check_branch
        %123 = sbr.rel (%p120) target = $region12
      $region11: #{tpu_custom_call.1} parent=5 // pred_region
        %s124 = ssub.s32 %s11, 1
        // Predicated region
        $region13: #{tpu_custom_call.1} parent=11 // pred_check
          %p125 = pneg %p44
        $region14: #{tpu_custom_call.1} parent=11 // pred_check_branch
          %127 = sbr.rel (%p125) target = $region16
        $region15: #{tpu_custom_call.1} parent=11 // pred_region
          _
        $region16: #{tpu_custom_call.1} parent=11 // pred_fallthru
          _
      $region12: #{tpu_custom_call.1} parent=5 // pred_fallthru
        _
      %p128 = scmp.lt.s32.totalorder %s11, 4
      // Predicated region
      $region17: #{tpu_custom_call.1} parent=5 // pred_check
        %p129 = pneg %p128
      $region18: #{tpu_custom_call.1} parent=5 // pred_check_branch
        %131 = sbr.rel (%p129) target = $region20
      $region19: #{tpu_custom_call.1} parent=5 // pred_region
        // Predicated region
        $region21: #{tpu_custom_call.1} parent=19 // pred_check
          %p132 = pneg %p70
        $region22: #{tpu_custom_call.1} parent=19 // pred_check_branch
          %134 = sbr.rel (%p132) target = $region24
        $region23: #{tpu_custom_call.1} parent=19 // pred_region
          %p135 = scmp.lt.s32.totalorder %s19, 0
          %s136 = scalar_select %p135, %s19, 0
          %p137 = scmp.lt.s32.totalorder %s18, 1
          %s138 = scalar_select %p137, %s18, 1
          %p139 = scmp.lt.s32.totalorder %s136, 0
          %s140 = scalar_select %p139, %s136, 0
          %s141 = sadd.s32 %s140, %s138
          %s142 = smul.addr %s141, 4
          %s143 = scalar_lea.vmem %s1, %s142
          %p144 = scmp.lt.s32.totalorder %s19, 0
          %s145 = scalar_select %p144, %s19, 0
        $region24: #{tpu_custom_call.1} parent=19 // pred_fallthru
          _
      $region20: #{tpu_custom_call.1} parent=5 // pred_fallthru
        _
      %p146 = scmp.le.s32.totalorder 1, %s11
      %p147 = scmp.lt.s32.totalorder %s11, 5
      %p148 = pnand %p146, %p147
      %p149 = pneg %p148
      // Predicated region
      $region25: #{tpu_custom_call.1} parent=5 // pred_check
        _
      $region26: #{tpu_custom_call.1} parent=5 // pred_check_branch
        %151 = sbr.rel (%p148) target = $region28
      $region27: #{tpu_custom_call.1} parent=5 // pred_region
        %s152 = ssub.s32 %s11, 1
        %p153 = pneg %p44
        %p154 = pneg %p41
        %p155 = scmp.lt.s32.totalorder %s21, 0
        %s156 = scalar_select %p155, %s21, 0
        %p157 = scmp.lt.s32.totalorder %s20, 1
        %s158 = scalar_select %p157, %s20, 1
        %p159 = scmp.lt.s32.totalorder %s156, 0
        %s160 = scalar_select %p159, %s156, 0
        %s161 = sadd.s32 %s160, %s158
        %s162 = smul.addr %s161, 4
        %s163 = scalar_lea.vmem %s1, %s162
        %p164 = pneg %p76
        %p165 = pneg %p73
        %p166 = pneg %p110
        %p167 = pneg %p107
        %s168 = sand.u32 %s97, 1
        %s169 = scalar_lea.sflag [#allocation4], %s168
        %s170 = sand.u32 %s97, 1
        %s171 = smul.addr %s170, 8
        %s172 = scalar_lea.vmem [#allocation3], %s171
        %p173 = scmp.lt.s32.totalorder %s21, 0
        %s174 = scalar_select %p173, %s21, 0
        %p175 = scmp.lt.s32.totalorder %s20, 1
        %s176 = scalar_select %p175, %s20, 1
        %p177 = scmp.lt.s32.totalorder %s174, 0
        %s178 = scalar_select %p177, %s174, 0
        %s179 = sadd.s32 %s178, %s176
        %s180 = smul.addr %s179, 4
        %s181 = scalar_lea.vmem %s1, %s180
        %p182 = scmp.lt.s32.totalorder %s21, 0
        %s183 = scalar_select %p182, %s21, 0
        %s184 = ssub.s32 %s21, 1
        %p185 = scmp.gt.s32.totalorder %s184, 0
        %s186 = scalar_select %p185, %s184, 0
        %v187 = vld [vmem:[%s181] sm:$0xf]
        %p188 = scmp.gt.s32.totalorder %s21, 0
        // Predicated region
        $region29: #{tpu_custom_call.1} parent=27 // pred_check
          %p189 = pneg %p188
        $region30: #{tpu_custom_call.1} parent=27 // pred_check_branch
          %191 = sbr.rel (%p189) target = $region32
        $region31: #{tpu_custom_call.1} parent=27 // pred_region
          %s192 = ssub.s32 %s21, 1
          %v193 = vld [vmem:[#allocation2] sm:$0xff]
          %v195 = vcombine.high %v193, %v193
          %198 = vrot.lane.b32.xlu0 %v187, 3
          %v199 = vpop.permute.xlu0 %198
          %vm201 = vcmask 23552
          %v202 = vsel %vm201, %v195, %v199
          %s203 = smul.u32 %s192, 128
          %s204 = ssub.s32 %s203, 3
          %v205 = vlaneseq
          %v206 = vand.u32 %v205, 127
          %v207 = vadd.s32 %v206, 128
          %v208 = vstv %s204
          %v209 = vadd.s32 %v208, %v206
          %v210 = vadd.s32 %v208, %v207
          %vm211 = vcmp.ge.s32.totalorder %v209, 0
          %vm212 = vcmp.ge.s32.totalorder %v210, 0
          %vm213 = vcmp.lt.s32.totalorder %v209, 16
          %vm214 = vcmp.lt.s32.totalorder %v210, 16
          %vm215 = vmand %vm211, %vm213
          %vm216 = vmand %vm212, %vm214
          %v217 = vsel %vm215, %v193, 0.0
          %v218 = vsel %vm216, %v202, 0.0
          %v219 = vld [vmem:[%s0] sm:$0xff]
          %s220 = scalar_lea.vmem %s0, 8
          %v221 = vld [vmem:[%s220] sm:$0xff]
          %224 = vrot.lane.b32.xlu0 %v217, 127
          %v225 = vpop.permute.xlu0 %224
          %226 = vrot.lane.b32.xlu0 %v218, 127
          %v227 = vpop.permute.xlu0 %226
          %vm228 = vcmask 1039360
          %v229 = vsel %vm228, %v225, %v227
          %vm230 = vcmask 31744
          %v232 = vsel %vm230, %v221, 0
          %vm234 = vcmask 1043456
          %v235 = vsel %vm234, %v229, 0
          %237 = vmatprep.subr.mxu0 0.0
          %238 = vmatpush1.msra.mxu0 %v235
          %239 = vmatprep.subr.mxu0 0.0
          %240 = vmatpush1.msra.mxu0 0.0
          %241 = vmatprep.subr.mxu0 0.0
          %242 = vmatpush1.msra.mxu0 0.0
          %243 = vmatprep.subr.mxu0 0.0
          %244 = vmatpush1.msra.mxu0 0.0
          %245 = vmatprep.subr.mxu0 0.0
          %246 = vmatpush1.msra.mxu0 0.0
          %247 = vmatprep.subr.mxu0 0.0
          %248 = vmatpush1.msra.mxu0 0.0
          %249 = vmatprep.subr.mxu0 0.0
          %250 = vmatpush1.msra.mxu0 0.0
          %251 = vmatprep.subr.mxu0 0.0
          %252 = vmatpush1.msra.mxu0 0.0
          %253 = vmatprep.subr.mxu0 0.0
          %254 = vmatpush1.msra.mxu0 0.0
          %255 = vmatprep.subr.mxu0 0.0
          %256 = vmatpush1.msra.mxu0 0.0
          %257 = vmatprep.subr.mxu0 0.0
          %258 = vmatpush1.msra.mxu0 0.0
          %259 = vmatprep.subr.mxu0 0.0
          %260 = vmatpush1.msra.mxu0 0.0
          %261 = vmatprep.subr.mxu0 0.0
          %262 = vmatpush1.msra.mxu0 0.0
          %263 = vmatprep.subr.mxu0 0.0
          %264 = vmatpush1.msra.mxu0 0.0
          %265 = vmatprep.subr.mxu0 0.0
          %266 = vmatpush1.msra.mxu0 0.0
          %267 = vmatprep.subr.mxu0 0.0
          %268 = vmatpush1.msra.mxu0 0.0
          %269 = vmatprep.subr.mxu0 0.0
          %270 = vmatpush1.msra.mxu0 0.0
          %271 = vmatprep.subr.mxu0 0.0
          %272 = vmatpush1.msra.mxu0 0.0
          %273 = vmatprep.subr.mxu0 0.0
          %274 = vmatpush1.msra.mxu0 0.0
          %275 = vmatprep.subr.mxu0 0.0
          %276 = vmatpush1.msra.mxu0 0.0
          %277 = vmatprep.subr.mxu0 0.0
          %278 = vmatpush1.msra.mxu0 0.0
          %279 = vmatprep.subr.mxu0 0.0
          %280 = vmatpush1.msra.mxu0 0.0
          %281 = vmatprep.subr.mxu0 0.0
          %282 = vmatpush1.msra.mxu0 0.0
          %283 = vmatprep.subr.mxu0 0.0
          %284 = vmatpush1.msra.mxu0 0.0
          %285 = vmatprep.subr.mxu0 0.0
          %286 = vmatpush1.msra.mxu0 0.0
          %287 = vmatprep.subr.mxu0 0.0
          %288 = vmatpush1.msra.mxu0 0.0
          %289 = vmatprep.subr.mxu0 0.0
          %290 = vmatpush1.msra.mxu0 0.0
          %291 = vmatprep.subr.mxu0 0.0
          %292 = vmatpush1.msra.mxu0 0.0
          %293 = vmatprep.subr.mxu0 0.0
          %294 = vmatpush1.msra.mxu0 0.0
          %295 = vmatprep.subr.mxu0 0.0
          %296 = vmatpush1.msra.mxu0 0.0
          %297 = vmatprep.subr.mxu0 0.0
          %298 = vmatpush1.msra.mxu0 0.0
          %299 = vmatprep.subr.mxu0 0.0
          %300 = vmatpush1.msra.mxu0 0.0
          %301 = vmatprep.mubr.f32.mxu0 0.0
          %302 = vmatmul.mubr.f32.gmra.mrb[0].mxu0 %v232
          %v303 = vpop.f32.mrb[0].mxu0
          %v304 = vadd.f32 0.0, %v303
          %v305 = vpop.f32.mrb[0].mxu0
          %306 = vdwg.mxu0
          %v308 = vsel %vm230, %v219, 0
          %v310 = vsel %vm234, %v217, 0
          %312 = vmatprep.subr.mxu0 0.0
          %313 = vmatpush1.msra.mxu0 %v310
          %314 = vmatprep.subr.mxu0 0.0
          %315 = vmatpush1.msra.mxu0 0.0
          %316 = vmatprep.subr.mxu0 0.0
          %317 = vmatpush1.msra.mxu0 0.0
          %318 = vmatprep.subr.mxu0 0.0
          %319 = vmatpush1.msra.mxu0 0.0
          %320 = vmatprep.subr.mxu0 0.0
          %321 = vmatpush1.msra.mxu0 0.0
          %322 = vmatprep.subr.mxu0 0.0
          %323 = vmatpush1.msra.mxu0 0.0
          %324 = vmatprep.subr.mxu0 0.0
          %325 = vmatpush1.msra.mxu0 0.0
          %326 = vmatprep.subr.mxu0 0.0
          %327 = vmatpush1.msra.mxu0 0.0
          %328 = vmatprep.subr.mxu0 0.0
          %329 = vmatpush1.msra.mxu0 0.0
          %330 = vmatprep.subr.mxu0 0.0
          %331 = vmatpush1.msra.mxu0 0.0
          %332 = vmatprep.subr.mxu0 0.0
          %333 = vmatpush1.msra.mxu0 0.0
          %334 = vmatprep.subr.mxu0 0.0
          %335 = vmatpush1.msra.mxu0 0.0
          %336 = vmatprep.subr.mxu0 0.0
          %337 = vmatpush1.msra.mxu0 0.0
          %338 = vmatprep.subr.mxu0 0.0
          %339 = vmatpush1.msra.mxu0 0.0
          %340 = vmatprep.subr.mxu0 0.0
          %341 = vmatpush1.msra.mxu0 0.0
          %342 = vmatprep.subr.mxu0 0.0
          %343 = vmatpush1.msra.mxu0 0.0
          %344 = vmatprep.subr.mxu0 0.0
          %345 = vmatpush1.msra.mxu0 0.0
          %346 = vmatprep.subr.mxu0 0.0
          %347 = vmatpush1.msra.mxu0 0.0
          %348 = vmatprep.subr.mxu0 0.0
          %349 = vmatpush1.msra.mxu0 0.0
          %350 = vmatprep.subr.mxu0 0.0
          %351 = vmatpush1.msra.mxu0 0.0
          %352 = vmatprep.subr.mxu0 0.0
          %353 = vmatpush1.msra.mxu0 0.0
          %354 = vmatprep.subr.mxu0 0.0
          %355 = vmatpush1.msra.mxu0 0.0
          %356 = vmatprep.subr.mxu0 0.0
          %357 = vmatpush1.msra.mxu0 0.0
          %358 = vmatprep.subr.mxu0 0.0
          %359 = vmatpush1.msra.mxu0 0.0
          %360 = vmatprep.subr.mxu0 0.0
          %361 = vmatpush1.msra.mxu0 0.0
          %362 = vmatprep.subr.mxu0 0.0
          %363 = vmatpush1.msra.mxu0 0.0
          %364 = vmatprep.subr.mxu0 0.0
          %365 = vmatpush1.msra.mxu0 0.0
          %366 = vmatprep.subr.mxu0 0.0
          %367 = vmatpush1.msra.mxu0 0.0
          %368 = vmatprep.subr.mxu0 0.0
          %369 = vmatpush1.msra.mxu0 0.0
          %370 = vmatprep.subr.mxu0 0.0
          %371 = vmatpush1.msra.mxu0 0.0
          %372 = vmatprep.subr.mxu0 0.0
          %373 = vmatpush1.msra.mxu0 0.0
          %374 = vmatprep.subr.mxu0 0.0
          %375 = vmatpush1.msra.mxu0 0.0
          %376 = vmatprep.mubr.f32.mxu0 0.0
          %377 = vmatmul.mubr.f32.gmra.mrb[0].mxu0 %v308
          %v378 = vpop.f32.mrb[0].mxu0
          %v379 = vadd.f32 %v304, %v378
          %v380 = vpop.f32.mrb[0].mxu0
          %381 = vdwg.mxu0
          %s382 = scalar_lea.vmem %s0, 16
          %v383 = vld [vmem:[%s382] sm:$0xff]
          %384 = vrot.lane.b32.xlu0 %v217, 126
          %v385 = vpop.permute.xlu0 %384
          %386 = vrot.lane.b32.xlu0 %v218, 126
          %v387 = vpop.permute.xlu0 %386
          %vm388 = vcmask 1031168
          %v389 = vsel %vm388, %v385, %v387
          %v391 = vsel %vm230, %v383, 0
          %v393 = vsel %vm234, %v389, 0
          %395 = vmatprep.subr.mxu0 0.0
          %396 = vmatpush1.msra.mxu0 %v393
          %397 = vmatprep.subr.mxu0 0.0
          %398 = vmatpush1.msra.mxu0 0.0
          %399 = vmatprep.subr.mxu0 0.0
          %400 = vmatpush1.msra.mxu0 0.0
          %401 = vmatprep.subr.mxu0 0.0
          %402 = vmatpush1.msra.mxu0 0.0
          %403 = vmatprep.subr.mxu0 0.0
          %404 = vmatpush1.msra.mxu0 0.0
          %405 = vmatprep.subr.mxu0 0.0
          %406 = vmatpush1.msra.mxu0 0.0
          %407 = vmatprep.subr.mxu0 0.0
          %408 = vmatpush1.msra.mxu0 0.0
          %409 = vmatprep.subr.mxu0 0.0
          %410 = vmatpush1.msra.mxu0 0.0
          %411 = vmatprep.subr.mxu0 0.0
          %412 = vmatpush1.msra.mxu0 0.0
          %413 = vmatprep.subr.mxu0 0.0
          %414 = vmatpush1.msra.mxu0 0.0
          %415 = vmatprep.subr.mxu0 0.0
          %416 = vmatpush1.msra.mxu0 0.0
          %417 = vmatprep.subr.mxu0 0.0
          %418 = vmatpush1.msra.mxu0 0.0
          %419 = vmatprep.subr.mxu0 0.0
          %420 = vmatpush1.msra.mxu0 0.0
          %421 = vmatprep.subr.mxu0 0.0
          %422 = vmatpush1.msra.mxu0 0.0
          %423 = vmatprep.subr.mxu0 0.0
          %424 = vmatpush1.msra.mxu0 0.0
          %425 = vmatprep.subr.mxu0 0.0
          %426 = vmatpush1.msra.mxu0 0.0
          %427 = vmatprep.subr.mxu0 0.0
          %428 = vmatpush1.msra.mxu0 0.0
          %429 = vmatprep.subr.mxu0 0.0
          %430 = vmatpush1.msra.mxu0 0.0
          %431 = vmatprep.subr.mxu0 0.0
          %432 = vmatpush1.msra.mxu0 0.0
          %433 = vmatprep.subr.mxu0 0.0
          %434 = vmatpush1.msra.mxu0 0.0
          %435 = vmatprep.subr.mxu0 0.0
          %436 = vmatpush1.msra.mxu0 0.0
          %437 = vmatprep.subr.mxu0 0.0
          %438 = vmatpush1.msra.mxu0 0.0
          %439 = vmatprep.subr.mxu0 0.0
          %440 = vmatpush1.msra.mxu0 0.0
          %441 = vmatprep.subr.mxu0 0.0
          %442 = vmatpush1.msra.mxu0 0.0
          %443 = vmatprep.subr.mxu0 0.0
          %444 = vmatpush1.msra.mxu0 0.0
          %445 = vmatprep.subr.mxu0 0.0
          %446 = vmatpush1.msra.mxu0 0.0
          %447 = vmatprep.subr.mxu0 0.0
          %448 = vmatpush1.msra.mxu0 0.0
          %449 = vmatprep.subr.mxu0 0.0
          %450 = vmatpush1.msra.mxu0 0.0
          %451 = vmatprep.subr.mxu0 0.0
          %452 = vmatpush1.msra.mxu0 0.0
          %453 = vmatprep.subr.mxu0 0.0
          %454 = vmatpush1.msra.mxu0 0.0
          %455 = vmatprep.subr.mxu0 0.0
          %456 = vmatpush1.msra.mxu0 0.0
          %457 = vmatprep.subr.mxu0 0.0
          %458 = vmatpush1.msra.mxu0 0.0
          %459 = vmatprep.mubr.f32.mxu0 0.0
          %460 = vmatmul.mubr.f32.gmra.mrb[0].mxu0 %v391
          %v461 = vpop.f32.mrb[0].mxu0
          %v462 = vadd.f32 0.0, %v461
          %v463 = vpop.f32.mrb[0].mxu0
          %464 = vdwg.mxu0
          %v465 = vadd.f32 %v379, %v462
          %s466 = scalar_lea.vmem %s0, 24
          %v467 = vld [vmem:[%s466] sm:$0xff]
          %468 = vrot.lane.b32.xlu0 %v217, 125
          %v469 = vpop.permute.xlu0 %468
          %470 = vrot.lane.b32.xlu0 %v218, 125
          %v471 = vpop.permute.xlu0 %470
          %vm472 = vcmask 1022976
          %v473 = vsel %vm472, %v469, %v471
          %v475 = vsel %vm230, %v467, 0
          %v477 = vsel %vm234, %v473, 0
          %479 = vmatprep.subr.mxu0 0.0
          %480 = vmatpush1.msra.mxu0 %v477
          %481 = vmatprep.subr.mxu0 0.0
          %482 = vmatpush1.msra.mxu0 0.0
          %483 = vmatprep.subr.mxu0 0.0
          %484 = vmatpush1.msra.mxu0 0.0
          %485 = vmatprep.subr.mxu0 0.0
          %486 = vmatpush1.msra.mxu0 0.0
          %487 = vmatprep.subr.mxu0 0.0
          %488 = vmatpush1.msra.mxu0 0.0
          %489 = vmatprep.subr.mxu0 0.0
          %490 = vmatpush1.msra.mxu0 0.0
          %491 = vmatprep.subr.mxu0 0.0
          %492 = vmatpush1.msra.mxu0 0.0
          %493 = vmatprep.subr.mxu0 0.0
          %494 = vmatpush1.msra.mxu0 0.0
          %495 = vmatprep.subr.mxu0 0.0
          %496 = vmatpush1.msra.mxu0 0.0
          %497 = vmatprep.subr.mxu0 0.0
          %498 = vmatpush1.msra.mxu0 0.0
          %499 = vmatprep.subr.mxu0 0.0
          %500 = vmatpush1.msra.mxu0 0.0
          %501 = vmatprep.subr.mxu0 0.0
          %502 = vmatpush1.msra.mxu0 0.0
          %503 = vmatprep.subr.mxu0 0.0
          %504 = vmatpush1.msra.mxu0 0.0
          %505 = vmatprep.subr.mxu0 0.0
          %506 = vmatpush1.msra.mxu0 0.0
          %507 = vmatprep.subr.mxu0 0.0
          %508 = vmatpush1.msra.mxu0 0.0
          %509 = vmatprep.subr.mxu0 0.0
          %510 = vmatpush1.msra.mxu0 0.0
          %511 = vmatprep.subr.mxu0 0.0
          %512 = vmatpush1.msra.mxu0 0.0
          %513 = vmatprep.subr.mxu0 0.0
          %514 = vmatpush1.msra.mxu0 0.0
          %515 = vmatprep.subr.mxu0 0.0
          %516 = vmatpush1.msra.mxu0 0.0
          %517 = vmatprep.subr.mxu0 0.0
          %518 = vmatpush1.msra.mxu0 0.0
          %519 = vmatprep.subr.mxu0 0.0
          %520 = vmatpush1.msra.mxu0 0.0
          %521 = vmatprep.subr.mxu0 0.0
          %522 = vmatpush1.msra.mxu0 0.0
          %523 = vmatprep.subr.mxu0 0.0
          %524 = vmatpush1.msra.mxu0 0.0
          %525 = vmatprep.subr.mxu0 0.0
          %526 = vmatpush1.msra.mxu0 0.0
          %527 = vmatprep.subr.mxu0 0.0
          %528 = vmatpush1.msra.mxu0 0.0
          %529 = vmatprep.subr.mxu0 0.0
          %530 = vmatpush1.msra.mxu0 0.0
          %531 = vmatprep.subr.mxu0 0.0
          %532 = vmatpush1.msra.mxu0 0.0
          %533 = vmatprep.subr.mxu0 0.0
          %534 = vmatpush1.msra.mxu0 0.0
          %535 = vmatprep.subr.mxu0 0.0
          %536 = vmatpush1.msra.mxu0 0.0
          %537 = vmatprep.subr.mxu0 0.0
          %538 = vmatpush1.msra.mxu0 0.0
          %539 = vmatprep.subr.mxu0 0.0
          %540 = vmatpush1.msra.mxu0 0.0
          %541 = vmatprep.subr.mxu0 0.0
          %542 = vmatpush1.msra.mxu0 0.0
          %543 = vmatprep.mubr.f32.mxu0 0.0
          %544 = vmatmul.mubr.f32.gmra.mrb[0].mxu0 %v475
          %v545 = vpop.f32.mrb[0].mxu0
          %v546 = vadd.f32 0.0, %v545
          %v547 = vpop.f32.mrb[0].mxu0
          %548 = vdwg.mxu0
          %v549 = vadd.f32 %v465, %v546
          %s550 = scalar_lea.vmem %s0, 32
          %v551 = vld [vmem:[%s550] sm:$0xff]
          %552 = vrot.lane.b32.xlu0 %v217, 124
          %v553 = vpop.permute.xlu0 %552
          %554 = vrot.lane.b32.xlu0 %v218, 124
          %v555 = vpop.permute.xlu0 %554
          %vm556 = vcmask 1014784
          %v557 = vsel %vm556, %v553, %v555
          %v559 = vsel %vm230, %v551, 0
          %v561 = vsel %vm234, %v557, 0
          %563 = vmatprep.subr.mxu0 0.0
          %564 = vmatpush1.msra.mxu0 %v561
          %565 = vmatprep.subr.mxu0 0.0
          %566 = vmatpush1.msra.mxu0 0.0
          %567 = vmatprep.subr.mxu0 0.0
          %568 = vmatpush1.msra.mxu0 0.0
          %569 = vmatprep.subr.mxu0 0.0
          %570 = vmatpush1.msra.mxu0 0.0
          %571 = vmatprep.subr.mxu0 0.0
          %572 = vmatpush1.msra.mxu0 0.0
          %573 = vmatprep.subr.mxu0 0.0
          %574 = vmatpush1.msra.mxu0 0.0
          %575 = vmatprep.subr.mxu0 0.0
          %576 = vmatpush1.msra.mxu0 0.0
          %577 = vmatprep.subr.mxu0 0.0
          %578 = vmatpush1.msra.mxu0 0.0
          %579 = vmatprep.subr.mxu0 0.0
          %580 = vmatpush1.msra.mxu0 0.0
          %581 = vmatprep.subr.mxu0 0.0
          %582 = vmatpush1.msra.mxu0 0.0
          %583 = vmatprep.subr.mxu0 0.0
          %584 = vmatpush1.msra.mxu0 0.0
          %585 = vmatprep.subr.mxu0 0.0
          %586 = vmatpush1.msra.mxu0 0.0
          %587 = vmatprep.subr.mxu0 0.0
          %588 = vmatpush1.msra.mxu0 0.0
          %589 = vmatprep.subr.mxu0 0.0
          %590 = vmatpush1.msra.mxu0 0.0
          %591 = vmatprep.subr.mxu0 0.0
          %592 = vmatpush1.msra.mxu0 0.0
          %593 = vmatprep.subr.mxu0 0.0
          %594 = vmatpush1.msra.mxu0 0.0
          %595 = vmatprep.subr.mxu0 0.0
          %596 = vmatpush1.msra.mxu0 0.0
          %597 = vmatprep.subr.mxu0 0.0
          %598 = vmatpush1.msra.mxu0 0.0
          %599 = vmatprep.subr.mxu0 0.0
          %600 = vmatpush1.msra.mxu0 0.0
          %601 = vmatprep.subr.mxu0 0.0
          %602 = vmatpush1.msra.mxu0 0.0
          %603 = vmatprep.subr.mxu0 0.0
          %604 = vmatpush1.msra.mxu0 0.0
          %605 = vmatprep.subr.mxu0 0.0
          %606 = vmatpush1.msra.mxu0 0.0
          %607 = vmatprep.subr.mxu0 0.0
          %608 = vmatpush1.msra.mxu0 0.0
          %609 = vmatprep.subr.mxu0 0.0
          %610 = vmatpush1.msra.mxu0 0.0
          %611 = vmatprep.subr.mxu0 0.0
          %612 = vmatpush1.msra.mxu0 0.0
          %613 = vmatprep.subr.mxu0 0.0
          %614 = vmatpush1.msra.mxu0 0.0
          %615 = vmatprep.subr.mxu0 0.0
          %616 = vmatpush1.msra.mxu0 0.0
          %617 = vmatprep.subr.mxu0 0.0
          %618 = vmatpush1.msra.mxu0 0.0
          %619 = vmatprep.subr.mxu0 0.0
          %620 = vmatpush1.msra.mxu0 0.0
          %621 = vmatprep.subr.mxu0 0.0
          %622 = vmatpush1.msra.mxu0 0.0
          %623 = vmatprep.subr.mxu0 0.0
          %624 = vmatpush1.msra.mxu0 0.0
          %625 = vmatprep.subr.mxu0 0.0
          %626 = vmatpush1.msra.mxu0 0.0
          %627 = vmatprep.mubr.f32.mxu0 0.0
          %628 = vmatmul.mubr.f32.gmra.mrb[0].mxu0 %v559
          %v629 = vpop.f32.mrb[0].mxu0
          %v630 = vadd.f32 0.0, %v629
          %v631 = vpop.f32.mrb[0].mxu0
          %632 = vdwg.mxu0
          %v633 = vadd.f32 %v549, %v630
          %s634 = scalar_lea.vmem %s0, 40
          %v635 = vld [vmem:[%s634] sm:$0xff]
          %636 = vrot.lane.b32.xlu0 %v217, 123
          %v637 = vpop.permute.xlu0 %636
          %638 = vrot.lane.b32.xlu0 %v218, 123
          %v639 = vpop.permute.xlu0 %638
          %vm640 = vcmask 1006592
          %v641 = vsel %vm640, %v637, %v639
          %v643 = vsel %vm230, %v635, 0
          %v645 = vsel %vm234, %v641, 0
          %647 = vmatprep.subr.mxu0 0.0
          %648 = vmatpush1.msra.mxu0 %v645
          %649 = vmatprep.subr.mxu0 0.0
          %650 = vmatpush1.msra.mxu0 0.0
          %651 = vmatprep.subr.mxu0 0.0
          %652 = vmatpush1.msra.mxu0 0.0
          %653 = vmatprep.subr.mxu0 0.0
          %654 = vmatpush1.msra.mxu0 0.0
          %655 = vmatprep.subr.mxu0 0.0
          %656 = vmatpush1.msra.mxu0 0.0
          %657 = vmatprep.subr.mxu0 0.0
          %658 = vmatpush1.msra.mxu0 0.0
          %659 = vmatprep.subr.mxu0 0.0
          %660 = vmatpush1.msra.mxu0 0.0
          %661 = vmatprep.subr.mxu0 0.0
          %662 = vmatpush1.msra.mxu0 0.0
          %663 = vmatprep.subr.mxu0 0.0
          %664 = vmatpush1.msra.mxu0 0.0
          %665 = vmatprep.subr.mxu0 0.0
          %666 = vmatpush1.msra.mxu0 0.0
          %667 = vmatprep.subr.mxu0 0.0
          %668 = vmatpush1.msra.mxu0 0.0
          %669 = vmatprep.subr.mxu0 0.0
          %670 = vmatpush1.msra.mxu0 0.0
          %671 = vmatprep.subr.mxu0 0.0
          %672 = vmatpush1.msra.mxu0 0.0
          %673 = vmatprep.subr.mxu0 0.0
          %674 = vmatpush1.msra.mxu0 0.0
          %675 = vmatprep.subr.mxu0 0.0
          %676 = vmatpush1.msra.mxu0 0.0
          %677 = vmatprep.subr.mxu0 0.0
          %678 = vmatpush1.msra.mxu0 0.0
          %679 = vmatprep.subr.mxu0 0.0
          %680 = vmatpush1.msra.mxu0 0.0
          %681 = vmatprep.subr.mxu0 0.0
          %682 = vmatpush1.msra.mxu0 0.0
          %683 = vmatprep.subr.mxu0 0.0
          %684 = vmatpush1.msra.mxu0 0.0
          %685 = vmatprep.subr.mxu0 0.0
          %686 = vmatpush1.msra.mxu0 0.0
          %687 = vmatprep.subr.mxu0 0.0
          %688 = vmatpush1.msra.mxu0 0.0
          %689 = vmatprep.subr.mxu0 0.0
          %690 = vmatpush1.msra.mxu0 0.0
          %691 = vmatprep.subr.mxu0 0.0
          %692 = vmatpush1.msra.mxu0 0.0
          %693 = vmatprep.subr.mxu0 0.0
          %694 = vmatpush1.msra.mxu0 0.0
          %695 = vmatprep.subr.mxu0 0.0
          %696 = vmatpush1.msra.mxu0 0.0
          %697 = vmatprep.subr.mxu0 0.0
          %698 = vmatpush1.msra.mxu0 0.0
          %699 = vmatprep.subr.mxu0 0.0
          %700 = vmatpush1.msra.mxu0 0.0
          %701 = vmatprep.subr.mxu0 0.0
          %702 = vmatpush1.msra.mxu0 0.0
          %703 = vmatprep.subr.mxu0 0.0
          %704 = vmatpush1.msra.mxu0 0.0
          %705 = vmatprep.subr.mxu0 0.0
          %706 = vmatpush1.msra.mxu0 0.0
          %707 = vmatprep.subr.mxu0 0.0
          %708 = vmatpush1.msra.mxu0 0.0
          %709 = vmatprep.subr.mxu0 0.0
          %710 = vmatpush1.msra.mxu0 0.0
          %711 = vmatprep.mubr.f32.mxu0 0.0
          %712 = vmatmul.mubr.f32.gmra.mrb[0].mxu0 %v643
          %v713 = vpop.f32.mrb[0].mxu0
          %v714 = vadd.f32 0.0, %v713
          %v715 = vpop.f32.mrb[0].mxu0
          %716 = vdwg.mxu0
          %v717 = vadd.f32 %v633, %v714
          %s718 = scalar_lea.vmem %s0, 48
          %v719 = vld [vmem:[%s718] sm:$0xff]
          %720 = vrot.lane.b32.xlu0 %v217, 122
          %v721 = vpop.permute.xlu0 %720
          %722 = vrot.lane.b32.xlu0 %v218, 122
          %v723 = vpop.permute.xlu0 %722
          %vm724 = vcmask 998400
          %v725 = vsel %vm724, %v721, %v723
          %v727 = vsel %vm230, %v719, 0
          %v729 = vsel %vm234, %v725, 0
          %731 = vmatprep.subr.mxu0 0.0
          %732 = vmatpush1.msra.mxu0 %v729
          %733 = vmatprep.subr.mxu0 0.0
          %734 = vmatpush1.msra.mxu0 0.0
          %735 = vmatprep.subr.mxu0 0.0
          %736 = vmatpush1.msra.mxu0 0.0
          %737 = vmatprep.subr.mxu0 0.0
          %738 = vmatpush1.msra.mxu0 0.0
          %739 = vmatprep.subr.mxu0 0.0
          %740 = vmatpush1.msra.mxu0 0.0
          %741 = vmatprep.subr.mxu0 0.0
          %742 = vmatpush1.msra.mxu0 0.0
          %743 = vmatprep.subr.mxu0 0.0
          %744 = vmatpush1.msra.mxu0 0.0
          %745 = vmatprep.subr.mxu0 0.0
          %746 = vmatpush1.msra.mxu0 0.0
          %747 = vmatprep.subr.mxu0 0.0
          %748 = vmatpush1.msra.mxu0 0.0
          %749 = vmatprep.subr.mxu0 0.0
          %750 = vmatpush1.msra.mxu0 0.0
          %751 = vmatprep.subr.mxu0 0.0
          %752 = vmatpush1.msra.mxu0 0.0
          %753 = vmatprep.subr.mxu0 0.0
          %754 = vmatpush1.msra.mxu0 0.0
          %755 = vmatprep.subr.mxu0 0.0
          %756 = vmatpush1.msra.mxu0 0.0
          %757 = vmatprep.subr.mxu0 0.0
          %758 = vmatpush1.msra.mxu0 0.0
          %759 = vmatprep.subr.mxu0 0.0
          %760 = vmatpush1.msra.mxu0 0.0
          %761 = vmatprep.subr.mxu0 0.0
          %762 = vmatpush1.msra.mxu0 0.0
          %763 = vmatprep.subr.mxu0 0.0
          %764 = vmatpush1.msra.mxu0 0.0
          %765 = vmatprep.subr.mxu0 0.0
          %766 = vmatpush1.msra.mxu0 0.0
          %767 = vmatprep.subr.mxu0 0.0
          %768 = vmatpush1.msra.mxu0 0.0
          %769 = vmatprep.subr.mxu0 0.0
          %770 = vmatpush1.msra.mxu0 0.0
          %771 = vmatprep.subr.mxu0 0.0
          %772 = vmatpush1.msra.mxu0 0.0
          %773 = vmatprep.subr.mxu0 0.0
          %774 = vmatpush1.msra.mxu0 0.0
          %775 = vmatprep.subr.mxu0 0.0
          %776 = vmatpush1.msra.mxu0 0.0
          %777 = vmatprep.subr.mxu0 0.0
          %778 = vmatpush1.msra.mxu0 0.0
          %779 = vmatprep.subr.mxu0 0.0
          %780 = vmatpush1.msra.mxu0 0.0
          %781 = vmatprep.subr.mxu0 0.0
          %782 = vmatpush1.msra.mxu0 0.0
          %783 = vmatprep.subr.mxu0 0.0
          %784 = vmatpush1.msra.mxu0 0.0
          %785 = vmatprep.subr.mxu0 0.0
          %786 = vmatpush1.msra.mxu0 0.0
          %787 = vmatprep.subr.mxu0 0.0
          %788 = vmatpush1.msra.mxu0 0.0
          %789 = vmatprep.subr.mxu0 0.0
          %790 = vmatpush1.msra.mxu0 0.0
          %791 = vmatprep.subr.mxu0 0.0
          %792 = vmatpush1.msra.mxu0 0.0
          %793 = vmatprep.subr.mxu0 0.0
          %794 = vmatpush1.msra.mxu0 0.0
          %795 = vmatprep.mubr.f32.mxu0 0.0
          %796 = vmatmul.mubr.f32.gmra.mrb[0].mxu0 %v727
          %v797 = vpop.f32.mrb[0].mxu0
          %v798 = vadd.f32 0.0, %v797
          %v799 = vpop.f32.mrb[0].mxu0
          %800 = vdwg.mxu0
          %v801 = vadd.f32 %v717, %v798
          %802 = vst [vmem:[%s172] sm:$0xff] %v801
        $region32: #{tpu_custom_call.1} parent=27 // pred_fallthru
          _
        %v803 = vld [vmem:[#allocation2 + $0x4] sm:$0xf]
        %vm804 = vcmask 19456
        %805 = vst.msk [vmem:[#allocation2] sm:$0xf] %vm804, %v803
        %807 = vrot.lane.b32.xlu0 %v187, 3
        %v808 = vpop.permute.xlu0 %807
        %v809 = vrot.slane %v808, 4
        %vm810 = vcmask 23552
        %v811 = vsel %vm810, %v809, %v808
        %vm813 = vcmask 1043480
        %vm814 = vcmask 23556
        %vm815 = vmor %vm814, %vm813
        %816 = vst.msk [vmem:[#allocation2] sm:$0xff] %vm815, %v811
        %s817 = sand.u32 %s97, 1
        %s818 = scalar_lea.sflag [#allocation4], %s817
        %s819 = sand.u32 %s97, 1
        %s820 = smul.addr %s819, 8
        %s821 = scalar_lea.vmem [#allocation3], %s820
        // Predicated region
        $region33: #{tpu_custom_call.1} parent=27 // pred_check
          %p822 = pneg %p107
        $region34: #{tpu_custom_call.1} parent=27 // pred_check_branch
          %824 = sbr.rel (%p822) target = $region36
        $region35: #{tpu_custom_call.1} parent=27 // pred_region
          %s825 = ssub.s32 %s21, 1
          %p826 = scmp.gt.s32.totalorder %s825, 0
          %s827 = scalar_select %p826, %s825, 0
          %s829 = ssub.s32 128, 128
          %830 = vsyncadd %s818, %s829
          %s831 = sadd.s32 %s827, %s20
          %s832 = smul.addr %s831, 128
          %s833 = scalar_lea.hbm %s2, %s832
          %s835 = sshll.u32 %s821, 4
          %s836 = int_to_ptr.vmem [resolvable:$true] %s835
          %838 = dma.vmem_to_hbm [thread:$0]  %s836, 128, %s833, %s818
        $region36: #{tpu_custom_call.1} parent=27 // pred_fallthru
          _
      $region28: #{tpu_custom_call.1} parent=5 // pred_fallthru
        _
      %p839 = scmp.le.s32.totalorder 2, %s11
      // Predicated region
      $region37: #{tpu_custom_call.1} parent=5 // pred_check
        %p840 = pneg %p839
      $region38: #{tpu_custom_call.1} parent=5 // pred_check_branch
        %842 = sbr.rel (%p840) target = $region40
      $region39: #{tpu_custom_call.1} parent=5 // pred_region
        %s843 = ssub.s32 %s11, 2
        // Predicated region
        $region41: #{tpu_custom_call.1} parent=39 // pred_check
          %p844 = pneg %p113
        $region42: #{tpu_custom_call.1} parent=39 // pred_check_branch
          %846 = sbr.rel (%p844) target = $region44
        $region43: #{tpu_custom_call.1} parent=39 // pred_region
          %s847 = sand.u32 %s98, 1
          %s848 = scalar_lea.sflag [#allocation4], %s847
          %s849 = sand.u32 %s98, 1
          %s850 = smul.addr %s849, 8
          %s851 = scalar_lea.vmem [#allocation3], %s850
          %852 = dma.done %s848, 128
        $region44: #{tpu_custom_call.1} parent=39 // pred_fallthru
          _
      $region40: #{tpu_custom_call.1} parent=5 // pred_fallthru
        _
    $region6: #{tpu_custom_call.1} parent=1 // loop_footer
      %s15 = sadd.s32 1, %s11
    $region7: #{tpu_custom_call.1} parent=1 // loop_footer_branch
      %10 = sbr.rel target = $region3
    $region8: #{tpu_custom_call.1} parent=1 // loop_exit
      _
    %853 = vsyncpa [#allocation4], 1
    %s854 = scalar_lea.sflag [#allocation4], 1
    %855 = vsyncpa %s854, 1

</llo_original>
